<compile_context>
chip_gen: v7x
topology: tpu7x:2x2x1
jax: 0.10.0
libtpu: 0.0.40
codegen_flags: <defaults>
</compile_context>

<pallas_src>
import jax
import jax.numpy as jnp
from jax.experimental import pallas as pl
from jax.experimental.pallas import tpu as pltpu

HIDDEN_SIZE = 128
ACTIONS_SIZE = 17
INPUT_SIZE = 2
IH_ROWS = 8         # sublane-padded row count for the tiny W_ih slab (2 real rows)
HEAD_PAD = 128      # fused head output width: 17 action lanes + 1 value lane + pad


def _policy_step(x0, x1, h, c, wih_ref, whh_ref, bg_ref, wheads_ref, bheads_ref):
    """One LSTMCell step + fused action/value head.  h, c: (1, H) f32."""
    # Input contribution: x has only 2 features, so skip the MXU entirely and
    # fold it in with a scalar-broadcast multiply-add on the VPU.
    x_contrib = x0 * wih_ref[0:1, :] + x1 * wih_ref[1:2, :]           # (1, 4H) f32

    # gates = x @ W_ih^T + h @ W_hh^T + (b_ih + b_hh)    (bf16 weights, f32 acc)
    gates = (x_contrib + bg_ref[...]
             + jnp.dot(h.astype(jnp.bfloat16), whh_ref[...],
                       preferred_element_type=jnp.float32))           # (1, 4H)

    H = HIDDEN_SIZE
    i_g = jax.nn.sigmoid(gates[:, 0 * H:1 * H])
    f_g = jax.nn.sigmoid(gates[:, 1 * H:2 * H])
    g_g = jnp.tanh(gates[:, 2 * H:3 * H])
    o_g = jax.nn.sigmoid(gates[:, 3 * H:4 * H])

    c_new = f_g * c + i_g * g_g
    h_new = o_g * jnp.tanh(c_new)

    # Fused heads: cols 0..16 = action head, col 17 = value head, rest zero.
    head = (jnp.dot(h_new.astype(jnp.bfloat16), wheads_ref[...],
                    preferred_element_type=jnp.float32)
            + bheads_ref[...])                                        # (1, 128)

    lane = jax.lax.broadcasted_iota(jnp.int32, (1, HEAD_PAD), 1)
    scores = jnp.where(lane < ACTIONS_SIZE, head, jnp.float32(-1e30))
    m = jnp.max(scores, axis=-1, keepdims=True)
    e = jnp.exp(scores - m)                                           # pad lanes -> 0
    probs = e * pl.reciprocal(jnp.sum(e, axis=-1, keepdims=True), approx=True)

    # One lane-dense (1, 128) row: probs in lanes 0..16, raw value at lane 17.
    out_row = probs + jnp.where(lane == ACTIONS_SIZE, head, jnp.float32(0.0))
    return out_row, h_new, c_new


def policy_kernel(x_ref, h_ref, c_ref,
                  wih_ref, whh_ref, bg_ref, wheads_ref, bheads_ref,
                  out_ref, h_out_ref, c_out_ref):
    out_row, h_new, c_new = _policy_step(
        x_ref[0], x_ref[1], h_ref[...], c_ref[...],
        wih_ref, whh_ref, bg_ref, wheads_ref, bheads_ref)
    out_ref[...] = out_row
    h_out_ref[...] = h_new
    c_out_ref[...] = c_new


def policy_rollout_kernel(xs_ref, h_ref, c_ref,
                          wih_ref, whh_ref, bg_ref, wheads_ref, bheads_ref,
                          outs_ref, h_out_ref, c_out_ref):
    """T sequential steps inside one kernel: weights DMA'd once, h/c carried."""
    T = outs_ref.shape[0]

    def step(t, carry):
        h, c = carry
        out_row, h_new, c_new = _policy_step(
            xs_ref[t, 0], xs_ref[t, 1], h, c,
            wih_ref, whh_ref, bg_ref, wheads_ref, bheads_ref)
        outs_ref[pl.ds(t, 1), :] = out_row
        return (h_new, c_new)

    h_fin, c_fin = jax.lax.fori_loop(0, T, step, (h_ref[...], c_ref[...]),
                                     unroll=True)
    h_out_ref[...] = h_fin
    c_out_ref[...] = c_fin


def init_params(key):
    """Deterministic init mimicking PyTorch's uniform(-1/sqrt(H), 1/sqrt(H))."""
    ks = jax.random.split(key, 8)
    bound = 1.0 / jnp.sqrt(jnp.float32(HIDDEN_SIZE))
    u = lambda k, shape: jax.random.uniform(k, shape, jnp.float32, -bound, bound)

    w_ih = u(ks[0], (4 * HIDDEN_SIZE, INPUT_SIZE))    # PyTorch layout (4H, in)
    w_hh = u(ks[1], (4 * HIDDEN_SIZE, HIDDEN_SIZE))
    b_ih = u(ks[2], (4 * HIDDEN_SIZE,))
    b_hh = u(ks[3], (4 * HIDDEN_SIZE,))
    w_act = u(ks[4], (ACTIONS_SIZE, HIDDEN_SIZE))
    b_act = u(ks[5], (ACTIONS_SIZE,))
    w_val = u(ks[6], (1, HIDDEN_SIZE))
    b_val = u(ks[7], (1,))

    # Tiny W_ih slab: rows 0..1 real, rows 2..7 sublane padding (f32, 16 KB).
    wih_pad = jnp.zeros((IH_ROWS, 4 * HIDDEN_SIZE), jnp.float32)
    wih_pad = wih_pad.at[:INPUT_SIZE, :].set(w_ih.T)

    # Recurrent weight in bf16 (f32 accumulate on the MXU).
    whh_t = w_hh.T.astype(jnp.bfloat16)                # (H, 4H)
    b_gates = (b_ih + b_hh).reshape(1, 4 * HIDDEN_SIZE)

    # Fused heads: cols 0..16 action head, col 17 value head, rest zero.
    w_heads = jnp.zeros((HIDDEN_SIZE, HEAD_PAD), jnp.float32)
    w_heads = w_heads.at[:, :ACTIONS_SIZE].set(w_act.T)
    w_heads = w_heads.at[:, ACTIONS_SIZE].set(w_val[0])
    w_heads = w_heads.astype(jnp.bfloat16)

    b_heads = jnp.zeros((1, HEAD_PAD), jnp.float32)
    b_heads = b_heads.at[0, :ACTIONS_SIZE].set(b_act)
    b_heads = b_heads.at[0, ACTIONS_SIZE].set(b_val[0])

    return dict(wih_pad=wih_pad, whh_t=whh_t, b_gates=b_gates,
                w_heads=w_heads, b_heads=b_heads)


_VMEM = pl.BlockSpec(memory_space=pltpu.MemorySpace.VMEM)
_SMEM = pl.BlockSpec(memory_space=pltpu.MemorySpace.SMEM)


@jax.jit
def policy_forward(x, h, c, params):
    """x: (2,) f32; h, c: (1, H) f32.
    Returns (probs (17,), value (1,), h_new (1,H), c_new (1,H))."""
    out_shapes = (
        jax.ShapeDtypeStruct((1, HEAD_PAD), jnp.float32),     # probs | value | pad
        jax.ShapeDtypeStruct((1, HIDDEN_SIZE), jnp.float32),  # h_new
        jax.ShapeDtypeStruct((1, HIDDEN_SIZE), jnp.float32),  # c_new
    )
    head_out, h_new, c_new = pl.pallas_call(
        policy_kernel,
        out_shape=out_shapes,
        in_specs=[_SMEM, _VMEM, _VMEM, _VMEM, _VMEM, _VMEM, _VMEM, _VMEM],
        out_specs=(_VMEM, _VMEM, _VMEM),
    )(x, h, c,
      params["wih_pad"], params["whh_t"], params["b_gates"],
      params["w_heads"], params["b_heads"])

    probs = head_out[0, :ACTIONS_SIZE]
    value = head_out[0, ACTIONS_SIZE:ACTIONS_SIZE + 1]
    return probs, value, h_new, c_new


@jax.jit
def policy_rollout(xs, h, c, params):
    """xs: (T, 2) f32 observations; h, c: (1, H) f32 initial state.
    Returns (probs (T,17), values (T,1), h_T (1,H), c_T (1,H))."""
    T = xs.shape[0]
    out_shapes = (
        jax.ShapeDtypeStruct((T, HEAD_PAD), jnp.float32),
        jax.ShapeDtypeStruct((1, HIDDEN_SIZE), jnp.float32),
        jax.ShapeDtypeStruct((1, HIDDEN_SIZE), jnp.float32),
    )
    outs, h_new, c_new = pl.pallas_call(
        policy_rollout_kernel,
        out_shape=out_shapes,
        in_specs=[_SMEM, _VMEM, _VMEM, _VMEM, _VMEM, _VMEM, _VMEM, _VMEM],
        out_specs=(_VMEM, _VMEM, _VMEM),
    )(xs, h, c,
      params["wih_pad"], params["whh_t"], params["b_gates"],
      params["w_heads"], params["b_heads"])

    probs = outs[:, :ACTIONS_SIZE]
    values = outs[:, ACTIONS_SIZE:ACTIONS_SIZE + 1]
    return probs, values, h_new, c_new


if __name__ == "__main__":
    key = jax.random.PRNGKey(0)
    k_param, k_x = jax.random.split(key)

    params = init_params(k_param)

    # Single-step forward (matches Policy.forward): 2-vector obs, zero hidden.
    x = jax.random.normal(k_x, (INPUT_SIZE,), jnp.float32)
    h0 = jnp.zeros((1, HIDDEN_SIZE), jnp.float32)
    c0 = jnp.zeros((1, HIDDEN_SIZE), jnp.float32)

    probs, value, h1, c1 = policy_forward(x, h0, c0, params)
    jax.block_until_ready((probs, value, h1, c1))

    assert probs.shape == (ACTIONS_SIZE,)
    assert value.shape == (1,)
    assert bool(jnp.isfinite(probs).all()) and bool(jnp.isfinite(value).all())
    assert float(jnp.min(probs)) >= 0.0
    assert abs(float(jnp.sum(probs)) - 1.0) < 2e-3   # approx-reciprocal softmax

    # Multi-step rollout kernel (weights loaded once) vs. repeated single steps.
    T = 8
    xs = jax.random.normal(jax.random.PRNGKey(1), (T, INPUT_SIZE), jnp.float32)
    probs_T, values_T, hT, cT = policy_rollout(xs, h0, c0, params)
    jax.block_until_ready((probs_T, values_T, hT, cT))

    h, c = h0, c0
    for t in range(T):
        p_t, v_t, h, c = policy_forward(xs[t], h, c, params)
    jax.block_until_ready((p_t, v_t, h, c))

    assert probs_T.shape == (T, ACTIONS_SIZE) and values_T.shape == (T, 1)
    assert bool(jnp.allclose(probs_T[-1], p_t, atol=1e-4))
    assert bool(jnp.allclose(values_T[-1], v_t, atol=1e-4))
    assert bool(jnp.allclose(hT, h, atol=1e-4))
    assert bool(jnp.allclose(cT, c, atol=1e-4))

    print("KERNEL_OK")
</pallas_src>

<mosaic_0001>
module attributes {stable_mosaic.version = 11 : i64} {
  func.func @policy_kernel(%arg0: memref<2xf32, #tpu.memory_space<smem>>, %arg1: memref<1x128xf32, #tpu.memory_space<vmem>>, %arg2: memref<1x128xf32, #tpu.memory_space<vmem>>, %arg3: memref<8x512xf32, #tpu.memory_space<vmem>>, %arg4: memref<128x512xbf16, #tpu.memory_space<vmem>>, %arg5: memref<1x512xf32, #tpu.memory_space<vmem>>, %arg6: memref<128x128xbf16, #tpu.memory_space<vmem>>, %arg7: memref<1x128xf32, #tpu.memory_space<vmem>>, %arg8: memref<1x128xf32, #tpu.memory_space<vmem>>, %arg9: memref<1x128xf32, #tpu.memory_space<vmem>>, %arg10: memref<1x128xf32, #tpu.memory_space<vmem>>) attributes {dimension_semantics = [], scalar_prefetch = 0 : i64, scratch_operands = 0 : i64, tpu.core_type = #tpu.core_type<tc>} {
    %c0 = arith.constant 0 : index
    %0 = memref.load %arg0[%c0] : memref<2xf32, #tpu.memory_space<smem>>
    %c1 = arith.constant 1 : index
    %1 = memref.load %arg0[%c1] : memref<2xf32, #tpu.memory_space<smem>>
    %c0_0 = arith.constant 0 : index
    %c0_1 = arith.constant 0 : index
    %2 = vector.load %arg1[%c0_0, %c0_1] : memref<1x128xf32, #tpu.memory_space<vmem>>, vector<1x128xf32>
    %c0_2 = arith.constant 0 : index
    %c0_3 = arith.constant 0 : index
    %3 = vector.load %arg2[%c0_2, %c0_3] : memref<1x128xf32, #tpu.memory_space<vmem>>, vector<1x128xf32>
    %c0_4 = arith.constant 0 : index
    %c0_5 = arith.constant 0 : index
    %4 = vector.load %arg3[%c0_4, %c0_5] : memref<8x512xf32, #tpu.memory_space<vmem>>, vector<1x512xf32>
    %5 = vector.broadcast %0 : f32 to vector<1x512xf32>
    %6 = arith.mulf %5, %4 : vector<1x512xf32>
    %c1_6 = arith.constant 1 : index
    %c0_7 = arith.constant 0 : index
    %7 = vector.load %arg3[%c1_6, %c0_7] : memref<8x512xf32, #tpu.memory_space<vmem>>, vector<1x512xf32>
    %8 = vector.broadcast %1 : f32 to vector<1x512xf32>
    %9 = arith.mulf %8, %7 : vector<1x512xf32>
    %10 = arith.addf %6, %9 : vector<1x512xf32>
    %c0_8 = arith.constant 0 : index
    %c0_9 = arith.constant 0 : index
    %11 = vector.load %arg5[%c0_8, %c0_9] : memref<1x512xf32, #tpu.memory_space<vmem>>, vector<1x512xf32>
    %12 = arith.addf %10, %11 : vector<1x512xf32>
    %13 = arith.truncf %2 : vector<1x128xf32> to vector<1x128xbf16>
    %c0_10 = arith.constant 0 : index
    %c0_11 = arith.constant 0 : index
    %14 = vector.load %arg4[%c0_10, %c0_11] : memref<128x512xbf16, #tpu.memory_space<vmem>>, vector<128x512xbf16>
    %cst = arith.constant dense<0.000000e+00> : vector<1x512xf32>
    %15 = tpu.matmul %13, %14, %cst {dimension_numbers = #tpu.dot_dimension_numbers<[1], [0], [0], [1], [0, 0, 1, 1], [], []>} : vector<1x128xbf16>, vector<128x512xbf16>, vector<1x512xf32> -> vector<1x512xf32>
    %16 = arith.addf %12, %15 : vector<1x512xf32>
    %17 = vector.extract_strided_slice %16 {offsets = [0, 0], sizes = [1, 128], strides = [1, 1]} : vector<1x512xf32> to vector<1x128xf32>
    %18 = arith.negf %17 : vector<1x128xf32>
    %19 = math.exp %18 : vector<1x128xf32>
    %cst_12 = arith.constant 1.000000e+00 : f32
    %20 = vector.broadcast %cst_12 : f32 to vector<1x128xf32>
    %21 = arith.addf %20, %19 : vector<1x128xf32>
    %22 = arith.divf %20, %21 : vector<1x128xf32>
    %23 = vector.extract_strided_slice %16 {offsets = [0, 128], sizes = [1, 128], strides = [1, 1]} : vector<1x512xf32> to vector<1x128xf32>
    %24 = arith.negf %23 : vector<1x128xf32>
    %25 = math.exp %24 : vector<1x128xf32>
    %cst_13 = arith.constant 1.000000e+00 : f32
    %26 = vector.broadcast %cst_13 : f32 to vector<1x128xf32>
    %27 = arith.addf %26, %25 : vector<1x128xf32>
    %28 = arith.divf %26, %27 : vector<1x128xf32>
    %29 = vector.extract_strided_slice %16 {offsets = [0, 256], sizes = [1, 128], strides = [1, 1]} : vector<1x512xf32> to vector<1x128xf32>
    %30 = math.tanh %29 : vector<1x128xf32>
    %31 = vector.extract_strided_slice %16 {offsets = [0, 384], sizes = [1, 128], strides = [1, 1]} : vector<1x512xf32> to vector<1x128xf32>
    %32 = arith.negf %31 : vector<1x128xf32>
    %33 = math.exp %32 : vector<1x128xf32>
    %cst_14 = arith.constant 1.000000e+00 : f32
    %34 = vector.broadcast %cst_14 : f32 to vector<1x128xf32>
    %35 = arith.addf %34, %33 : vector<1x128xf32>
    %36 = arith.divf %34, %35 : vector<1x128xf32>
    %37 = arith.mulf %28, %3 : vector<1x128xf32>
    %38 = arith.mulf %22, %30 : vector<1x128xf32>
    %39 = arith.addf %37, %38 : vector<1x128xf32>
    %40 = math.tanh %39 : vector<1x128xf32>
    %41 = arith.mulf %36, %40 : vector<1x128xf32>
    %42 = arith.truncf %41 : vector<1x128xf32> to vector<1x128xbf16>
    %c0_15 = arith.constant 0 : index
    %c0_16 = arith.constant 0 : index
    %43 = vector.load %arg6[%c0_15, %c0_16] : memref<128x128xbf16, #tpu.memory_space<vmem>>, vector<128x128xbf16>
    %cst_17 = arith.constant dense<0.000000e+00> : vector<1x128xf32>
    %44 = tpu.matmul %42, %43, %cst_17 {dimension_numbers = #tpu.dot_dimension_numbers<[1], [0], [0], [1], [0, 0, 1, 1], [], []>} : vector<1x128xbf16>, vector<128x128xbf16>, vector<1x128xf32> -> vector<1x128xf32>
    %c0_18 = arith.constant 0 : index
    %c0_19 = arith.constant 0 : index
    %45 = vector.load %arg7[%c0_18, %c0_19] : memref<1x128xf32, #tpu.memory_space<vmem>>, vector<1x128xf32>
    %46 = arith.addf %44, %45 : vector<1x128xf32>
    %47 = tpu.iota {dimensions = array<i32: 1>} : vector<1x128xi32>
    %c17_i32 = arith.constant 17 : i32
    %48 = vector.broadcast %c17_i32 : i32 to vector<1x128xi32>
    %49 = arith.cmpi slt, %47, %48 : vector<1x128xi32>
    %cst_20 = arith.constant -1.000000e+30 : f32
    %50 = vector.broadcast %cst_20 : f32 to vector<1x128xf32>
    %51 = arith.select %49, %46, %50 : vector<1x128xi1>, vector<1x128xf32>
    %cst_21 = arith.constant dense<0xFF800000> : vector<1xf32>
    %52 = vector.multi_reduction <maximumf>, %51, %cst_21 [1] : vector<1x128xf32> to vector<1xf32>
    %53 = vector.shape_cast %52 : vector<1xf32> to vector<1x1xf32>
    %54 = vector.broadcast %53 : vector<1x1xf32> to vector<1x128xf32>
    %55 = arith.subf %51, %54 : vector<1x128xf32>
    %56 = math.exp %55 : vector<1x128xf32>
    %cst_22 = arith.constant dense<0.000000e+00> : vector<1xf32>
    %57 = vector.multi_reduction <add>, %56, %cst_22 [1] : vector<1x128xf32> to vector<1xf32>
    %58 = vector.shape_cast %57 : vector<1xf32> to vector<1x1xf32>
    %59 = tpu.reciprocal %58 {approx = true} : vector<1x1xf32> -> vector<1x1xf32>
    %60 = vector.broadcast %59 : vector<1x1xf32> to vector<1x128xf32>
    %61 = arith.mulf %56, %60 : vector<1x128xf32>
    %c17_i32_23 = arith.constant 17 : i32
    %62 = vector.broadcast %c17_i32_23 : i32 to vector<1x128xi32>
    %63 = arith.cmpi eq, %47, %62 : vector<1x128xi32>
    %cst_24 = arith.constant 0.000000e+00 : f32
    %64 = vector.broadcast %cst_24 : f32 to vector<1x128xf32>
    %65 = arith.select %63, %46, %64 : vector<1x128xi1>, vector<1x128xf32>
    %66 = arith.addf %61, %65 : vector<1x128xf32>
    %c0_25 = arith.constant 0 : index
    %c0_26 = arith.constant 0 : index
    %67 = vector.load %arg8[%c0_25, %c0_26] : memref<1x128xf32, #tpu.memory_space<vmem>>, vector<1x128xf32>
    tpu.vector_store %arg8[%c0_25, %c0_26], %66 {strides = array<i32>} : memref<1x128xf32, #tpu.memory_space<vmem>>, vector<1x128xf32>,
    %c0_27 = arith.constant 0 : index
    %c0_28 = arith.constant 0 : index
    %68 = vector.load %arg9[%c0_27, %c0_28] : memref<1x128xf32, #tpu.memory_space<vmem>>, vector<1x128xf32>
    tpu.vector_store %arg9[%c0_27, %c0_28], %41 {strides = array<i32>} : memref<1x128xf32, #tpu.memory_space<vmem>>, vector<1x128xf32>,
    %c0_29 = arith.constant 0 : index
    %c0_30 = arith.constant 0 : index
    %69 = vector.load %arg10[%c0_29, %c0_30] : memref<1x128xf32, #tpu.memory_space<vmem>>, vector<1x128xf32>
    tpu.vector_store %arg10[%c0_29, %c0_30], %39 {strides = array<i32>} : memref<1x128xf32, #tpu.memory_space<vmem>>, vector<1x128xf32>,
    return
  }
}

</mosaic_0001>

<llo_original>
// kernel: policy_forward.1
$region0: #{policy_forward.1}
  #allocation0 [shape = 'u32[]', space=smem, size = 0x4, offset = 0x4, fixed_abs, tag = 'smem constant byte address 0x4 - core index']
  #allocation1 [shape = 'u32[144,128]{1,0:T(1,128)}', space=vmem, size = 0x12000, scoped, tag = 'internal scratch']
  %s0 = inlined_call_operand.hbm [shape: f32[2], index: 0, kind: input, shape index: {}]
  %s1 = inlined_call_operand.vmem [shape: f32[1,128], index: 1, kind: input, shape index: {}]
  %s2 = inlined_call_operand.vmem [shape: f32[1,128], index: 2, kind: input, shape index: {}]
  %s3 = inlined_call_operand.hbm [shape: f32[8,512], index: 3, kind: input, shape index: {}]
  %s4 = inlined_call_operand.hbm [shape: bf16[128,512], index: 4, kind: input, shape index: {}]
  %s5 = inlined_call_operand.vmem [shape: f32[1,512], index: 5, kind: input, shape index: {}]
  %s6 = inlined_call_operand.hbm [shape: bf16[128,128], index: 6, kind: input, shape index: {}]
  %s7 = inlined_call_operand.vmem [shape: f32[1,128], index: 7, kind: input, shape index: {}]
  %s8 = inlined_call_operand.vmem [shape: f32[1,128], index: 8, kind: output, shape index: {0}]
  %s9 = inlined_call_operand.hbm [shape: f32[1,128], index: 9, kind: output, shape index: {1}]
  %s10 = inlined_call_operand.hbm [shape: f32[1,128], index: 10, kind: output, shape index: {2}]
  %11 = xla_tuple %s8, %s9, %s10
  %s12 = sld [smem:[#allocation0]]
  $region74: #{policy_forward.1} parent=0
    _
  %s14 = ssub.s32 1, %s12
  %s15 = scalar_select 0, %s14, %s12
  $region1: #{policy_forward.1} parent=0
    #allocation2 [shape = 'u8[512]{0}', space=smem, size = 0x200, scoped, tag = 'input window, operand 0, single buffered']
    #allocation3 [shape = 's32[1]{0}', space=sflag, size = 0x4, scoped, tag = 'scoped memory for policy_forward.1']
    #allocation4 [shape = 's32[1]{0}', space=sflag, size = 0x4, scoped, tag = 'scoped memory for policy_forward.1']
    #allocation5 [shape = 's32[1]{0}', space=sflag, size = 0x4, scoped, tag = 'scoped memory for policy_forward.1']
    #allocation6 [shape = 'u8[16384]{0}', space=vmem, size = 0x4000, scoped, tag = 'input window, operand 3, single buffered']
    #allocation7 [shape = 'u8[131072]{0}', space=vmem, size = 0x20000, scoped, tag = 'input window, operand 4, single buffered']
    #allocation8 [shape = 's32[1]{0}', space=sflag, size = 0x4, scoped, tag = 'scoped memory for policy_forward.1']
    #allocation9 [shape = 'u8[32768]{0}', space=vmem, size = 0x8000, scoped, tag = 'input window, operand 6, single buffered']
    #allocation10 [shape = 'u8[512]{0}', space=vmem, size = 0x400, scoped, tag = 'output window, operand 1, single buffered']
    #allocation11 [shape = 'u8[512]{0}', space=vmem, size = 0x400, scoped, tag = 'output window, operand 2, single buffered']
    #allocation12 [shape = 's32[1]{0}', space=sflag, size = 0x4, scoped, tag = 'scoped memory for policy_forward.1']
    %16 = vsyncpa [#allocation5], 0
    %17 = vsyncpa [#allocation3], 0
    %18 = vsyncpa [#allocation8], 0
    %19 = vsyncpa [#allocation4], 0
    %20 = vsyncpa [#allocation12], 0
    // Predicated region
    $region2: #{policy_forward.1} parent=1 // pred_check
      _
    $region3: #{policy_forward.1} parent=1 // pred_check_branch
      %22 = sbr.rel (0) target = $region5
    $region4: #{policy_forward.1} parent=1 // pred_region
      %s24 = ssub.s32 16, 16
      %25 = vsyncadd [#allocation5], %s24
      %28 = dma.hbm_to_smem %s0, 16, [#allocation2], [#allocation5]
    $region5: #{policy_forward.1} parent=1 // pred_fallthru
      _
    // Predicated region
    $region6: #{policy_forward.1} parent=1 // pred_check
      _
    $region7: #{policy_forward.1} parent=1 // pred_check_branch
      %30 = sbr.rel (0) target = $region9
    $region8: #{policy_forward.1} parent=1 // pred_region
      _
    $region9: #{policy_forward.1} parent=1 // pred_fallthru
      _
    // Predicated region
    $region10: #{policy_forward.1} parent=1 // pred_check
      _
    $region11: #{policy_forward.1} parent=1 // pred_check_branch
      %32 = sbr.rel (0) target = $region13
    $region12: #{policy_forward.1} parent=1 // pred_region
      _
    $region13: #{policy_forward.1} parent=1 // pred_fallthru
      _
    // Predicated region
    $region14: #{policy_forward.1} parent=1 // pred_check
      _
    $region15: #{policy_forward.1} parent=1 // pred_check_branch
      %34 = sbr.rel (0) target = $region17
    $region16: #{policy_forward.1} parent=1 // pred_region
      %s36 = ssub.s32 512, 512
      %37 = vsyncadd [#allocation3], %s36
      %s39 = sshll.u32 [#allocation6], 4
      %s40 = int_to_ptr.vmem [resolvable:$true] %s39
      %42 = dma.hbm_to_vmem [thread:$0]  %s3, 512, %s40, [#allocation3]
    $region17: #{policy_forward.1} parent=1 // pred_fallthru
      _
    // Predicated region
    $region18: #{policy_forward.1} parent=1 // pred_check
      _
    $region19: #{policy_forward.1} parent=1 // pred_check_branch
      %44 = sbr.rel (0) target = $region21
    $region20: #{policy_forward.1} parent=1 // pred_region
      %s46 = ssub.s32 4096, 4096
      %47 = vsyncadd [#allocation8], %s46
      %s48 = sshll.u32 [#allocation7], 4
      %s49 = int_to_ptr.vmem [resolvable:$true] %s48
      %54 = dma.hbm_to_vmem [thread:$0]  %s4, 4096, %s49, [#allocation8], 256, 256, 16
    $region21: #{policy_forward.1} parent=1 // pred_fallthru
      _
    // Predicated region
    $region22: #{policy_forward.1} parent=1 // pred_check
      _
    $region23: #{policy_forward.1} parent=1 // pred_check_branch
      %56 = sbr.rel (0) target = $region25
    $region24: #{policy_forward.1} parent=1 // pred_region
      _
    $region25: #{policy_forward.1} parent=1 // pred_fallthru
      _
    // Predicated region
    $region26: #{policy_forward.1} parent=1 // pred_check
      _
    $region27: #{policy_forward.1} parent=1 // pred_check_branch
      %58 = sbr.rel (0) target = $region29
    $region28: #{policy_forward.1} parent=1 // pred_region
      %s60 = ssub.s32 1024, 1024
      %61 = vsyncadd [#allocation8], %s60
      %s62 = sshll.u32 [#allocation9], 4
      %s63 = int_to_ptr.vmem [resolvable:$true] %s62
      %68 = dma.hbm_to_vmem [thread:$0]  %s6, 1024, %s63, [#allocation8], 64, 64, 4
    $region29: #{policy_forward.1} parent=1 // pred_fallthru
      _
    // Predicated region
    $region30: #{policy_forward.1} parent=1 // pred_check
      _
    $region31: #{policy_forward.1} parent=1 // pred_check_branch
      %70 = sbr.rel (0) target = $region33
    $region32: #{policy_forward.1} parent=1 // pred_region
      _
    $region33: #{policy_forward.1} parent=1 // pred_fallthru
      _
    // Predicated region
    $region34: #{policy_forward.1} parent=1 // pred_check
      _
    $region35: #{policy_forward.1} parent=1 // pred_check_branch
      %72 = sbr.rel (0) target = $region37
    $region36: #{policy_forward.1} parent=1 // pred_region
      %73 = dma.done [#allocation5], 16
    $region37: #{policy_forward.1} parent=1 // pred_fallthru
      _
    // Predicated region
    $region38: #{policy_forward.1} parent=1 // pred_check
      _
    $region39: #{policy_forward.1} parent=1 // pred_check_branch
      %75 = sbr.rel (0) target = $region41
    $region40: #{policy_forward.1} parent=1 // pred_region
      %76 = dma.done [#allocation3], 512
    $region41: #{policy_forward.1} parent=1 // pred_fallthru
      _
    // Predicated region
    $region42: #{policy_forward.1} parent=1 // pred_check
      _
    $region43: #{policy_forward.1} parent=1 // pred_check_branch
      %78 = sbr.rel (0) target = $region45
    $region44: #{policy_forward.1} parent=1 // pred_region
      %79 = dma.done [#allocation8], 4096
    $region45: #{policy_forward.1} parent=1 // pred_fallthru
      _
    // Predicated region
    $region46: #{policy_forward.1} parent=1 // pred_check
      _
    $region47: #{policy_forward.1} parent=1 // pred_check_branch
      %81 = sbr.rel (0) target = $region49
    $region48: #{policy_forward.1} parent=1 // pred_region
      %82 = dma.done [#allocation8], 1024
    $region49: #{policy_forward.1} parent=1 // pred_fallthru
      _
    %83 = sfence
    %s85 = sld [smem:[#allocation2]]
    %s86 = sld [smem:[#allocation2 + $0x1]]
    %v87 = vld [vmem:[%s1] sm:$0x1]
    %v88 = vld [vmem:[%s2] sm:$0x1]
    %v89 = vld [vmem:[#allocation6] ss:$8 sm:$0xf]
    %v90 = vstv %s85
    %v91 = vmul.f32 %v90, %v89
    %s92 = scalar_lea.vmem [#allocation6], 1
    %v93 = vld [vmem:[%s92] ss:$8 sm:$0xf]
    %v94 = vstv %s86
    %v95 = vmul.f32 %v94, %v93
    %v96 = vadd.f32 %v91, %v95
    %v97 = vld [vmem:[%s5] sm:$0xf]
    %v98 = vadd.f32 %v96, %v97
    %v99 = vpack.c.bf16 %v87, %v87
    %v100 = vld [vmem:[#allocation7] sm:$0xff]
    %v101 = vld [vmem:[#allocation7 + $0x8] sm:$0xff]
    %v102 = vld [vmem:[#allocation7 + $0x10] sm:$0xff]
    %v103 = vld [vmem:[#allocation7 + $0x18] sm:$0xff]
    %v104 = vld [vmem:[#allocation7 + $0x20] sm:$0xff]
    %v105 = vld [vmem:[#allocation7 + $0x28] sm:$0xff]
    %v106 = vld [vmem:[#allocation7 + $0x30] sm:$0xff]
    %v107 = vld [vmem:[#allocation7 + $0x38] sm:$0xff]
    %v108 = vld [vmem:[#allocation7 + $0x40] sm:$0xff]
    %v109 = vld [vmem:[#allocation7 + $0x48] sm:$0xff]
    %v110 = vld [vmem:[#allocation7 + $0x50] sm:$0xff]
    %v111 = vld [vmem:[#allocation7 + $0x58] sm:$0xff]
    %v112 = vld [vmem:[#allocation7 + $0x60] sm:$0xff]
    %v113 = vld [vmem:[#allocation7 + $0x68] sm:$0xff]
    %v114 = vld [vmem:[#allocation7 + $0x70] sm:$0xff]
    %v115 = vld [vmem:[#allocation7 + $0x78] sm:$0xff]
    %v116 = vld [vmem:[#allocation7 + $0x80] sm:$0xff]
    %v117 = vld [vmem:[#allocation7 + $0x88] sm:$0xff]
    %v118 = vld [vmem:[#allocation7 + $0x90] sm:$0xff]
    %v119 = vld [vmem:[#allocation7 + $0x98] sm:$0xff]
    %v120 = vld [vmem:[#allocation7 + $0xa0] sm:$0xff]
    %v121 = vld [vmem:[#allocation7 + $0xa8] sm:$0xff]
    %v122 = vld [vmem:[#allocation7 + $0xb0] sm:$0xff]
    %v123 = vld [vmem:[#allocation7 + $0xb8] sm:$0xff]
    %v124 = vld [vmem:[#allocation7 + $0xc0] sm:$0xff]
    %v125 = vld [vmem:[#allocation7 + $0xc8] sm:$0xff]
    %v126 = vld [vmem:[#allocation7 + $0xd0] sm:$0xff]
    %v127 = vld [vmem:[#allocation7 + $0xd8] sm:$0xff]
    %v128 = vld [vmem:[#allocation7 + $0xe0] sm:$0xff]
    %v129 = vld [vmem:[#allocation7 + $0xe8] sm:$0xff]
    %v130 = vld [vmem:[#allocation7 + $0xf0] sm:$0xff]
    %v131 = vld [vmem:[#allocation7 + $0xf8] sm:$0xff]
    %v164 = vunpack.c.l.b16 %v100
    %v165 = vunpack.c.h.b16 %v100
    %v166 = vunpack.c.l.b16 %v101
    %v167 = vunpack.c.h.b16 %v101
    %v168 = vunpack.c.l.b16 %v102
    %v169 = vunpack.c.h.b16 %v102
    %v170 = vunpack.c.l.b16 %v103
    %v171 = vunpack.c.h.b16 %v103
    %v172 = vunpack.c.l.b16 %v104
    %v173 = vunpack.c.h.b16 %v104
    %v174 = vunpack.c.l.b16 %v105
    %v175 = vunpack.c.h.b16 %v105
    %v176 = vunpack.c.l.b16 %v106
    %v177 = vunpack.c.h.b16 %v106
    %v178 = vunpack.c.l.b16 %v107
    %v179 = vunpack.c.h.b16 %v107
    %v180 = vunpack.c.l.b16 %v108
    %v181 = vunpack.c.h.b16 %v108
    %v182 = vunpack.c.l.b16 %v109
    %v183 = vunpack.c.h.b16 %v109
    %v184 = vunpack.c.l.b16 %v110
    %v185 = vunpack.c.h.b16 %v110
    %v186 = vunpack.c.l.b16 %v111
    %v187 = vunpack.c.h.b16 %v111
    %v188 = vunpack.c.l.b16 %v112
    %v189 = vunpack.c.h.b16 %v112
    %v190 = vunpack.c.l.b16 %v113
    %v191 = vunpack.c.h.b16 %v113
    %v192 = vunpack.c.l.b16 %v114
    %v193 = vunpack.c.h.b16 %v114
    %v194 = vunpack.c.l.b16 %v115
    %v195 = vunpack.c.h.b16 %v115
    %v196 = vunpack.c.l.b16 %v116
    %v197 = vunpack.c.h.b16 %v116
    %v198 = vunpack.c.l.b16 %v117
    %v199 = vunpack.c.h.b16 %v117
    %v200 = vunpack.c.l.b16 %v118
    %v201 = vunpack.c.h.b16 %v118
    %v202 = vunpack.c.l.b16 %v119
    %v203 = vunpack.c.h.b16 %v119
    %v204 = vunpack.c.l.b16 %v120
    %v205 = vunpack.c.h.b16 %v120
    %v206 = vunpack.c.l.b16 %v121
    %v207 = vunpack.c.h.b16 %v121
    %v208 = vunpack.c.l.b16 %v122
    %v209 = vunpack.c.h.b16 %v122
    %v210 = vunpack.c.l.b16 %v123
    %v211 = vunpack.c.h.b16 %v123
    %v212 = vunpack.c.l.b16 %v124
    %v213 = vunpack.c.h.b16 %v124
    %v214 = vunpack.c.l.b16 %v125
    %v215 = vunpack.c.h.b16 %v125
    %v216 = vunpack.c.l.b16 %v126
    %v217 = vunpack.c.h.b16 %v126
    %v218 = vunpack.c.l.b16 %v127
    %v219 = vunpack.c.h.b16 %v127
    %v220 = vunpack.c.l.b16 %v128
    %v221 = vunpack.c.h.b16 %v128
    %v222 = vunpack.c.l.b16 %v129
    %v223 = vunpack.c.h.b16 %v129
    %v224 = vunpack.c.l.b16 %v130
    %v225 = vunpack.c.h.b16 %v130
    %v226 = vunpack.c.l.b16 %v131
    %v227 = vunpack.c.h.b16 %v131
    %v228 = vpack.c.b16 %v168, %v164
    %v229 = vpack.c.b16 %v169, %v165
    %v230 = vpack.c.b16 %v170, %v166
    %v231 = vpack.c.b16 %v171, %v167
    %v232 = vpack.c.b16 %v176, %v172
    %v233 = vpack.c.b16 %v177, %v173
    %v234 = vpack.c.b16 %v178, %v174
    %v235 = vpack.c.b16 %v179, %v175
    %v236 = vpack.c.b16 %v184, %v180
    %v237 = vpack.c.b16 %v185, %v181
    %v238 = vpack.c.b16 %v186, %v182
    %v239 = vpack.c.b16 %v187, %v183
    %v240 = vpack.c.b16 %v192, %v188
    %v241 = vpack.c.b16 %v193, %v189
    %v242 = vpack.c.b16 %v194, %v190
    %v243 = vpack.c.b16 %v195, %v191
    %v244 = vpack.c.b16 %v200, %v196
    %v245 = vpack.c.b16 %v201, %v197
    %v246 = vpack.c.b16 %v202, %v198
    %v247 = vpack.c.b16 %v203, %v199
    %v248 = vpack.c.b16 %v208, %v204
    %v249 = vpack.c.b16 %v209, %v205
    %v250 = vpack.c.b16 %v210, %v206
    %v251 = vpack.c.b16 %v211, %v207
    %v252 = vpack.c.b16 %v216, %v212
    %v253 = vpack.c.b16 %v217, %v213
    %v254 = vpack.c.b16 %v218, %v214
    %v255 = vpack.c.b16 %v219, %v215
    %v256 = vpack.c.b16 %v224, %v220
    %v257 = vpack.c.b16 %v225, %v221
    %v258 = vpack.c.b16 %v226, %v222
    %v259 = vpack.c.b16 %v227, %v223
    %292 = vmatprep.subr.bf16.mxu0 %v229
    %293 = vmatpush1.bf16.msra.mxu0 %v228
    %294 = vmatprep.subr.bf16.mxu0 %v233
    %295 = vmatpush1.bf16.msra.mxu0 %v232
    %296 = vmatprep.subr.bf16.mxu0 %v237
    %297 = vmatpush1.bf16.msra.mxu0 %v236
    %298 = vmatprep.subr.bf16.mxu0 %v241
    %299 = vmatpush1.bf16.msra.mxu0 %v240
    %300 = vmatprep.subr.bf16.mxu0 %v245
    %301 = vmatpush1.bf16.msra.mxu0 %v244
    %302 = vmatprep.subr.bf16.mxu0 %v249
    %303 = vmatpush1.bf16.msra.mxu0 %v248
    %304 = vmatprep.subr.bf16.mxu0 %v253
    %305 = vmatpush1.bf16.msra.mxu0 %v252
    %306 = vmatprep.subr.bf16.mxu0 %v257
    %307 = vmatpush1.bf16.msra.mxu0 %v256
    %308 = vmatprep.subr.bf16.mxu0 0
    %309 = vmatpush1.bf16.msra.mxu0 0
    %310 = vmatprep.subr.bf16.mxu0 0
    %311 = vmatpush1.bf16.msra.mxu0 0
    %312 = vmatprep.subr.bf16.mxu0 0
    %313 = vmatpush1.bf16.msra.mxu0 0
    %314 = vmatprep.subr.bf16.mxu0 0
    %315 = vmatpush1.bf16.msra.mxu0 0
    %316 = vmatprep.subr.bf16.mxu0 0
    %317 = vmatpush1.bf16.msra.mxu0 0
    %318 = vmatprep.subr.bf16.mxu0 0
    %319 = vmatpush1.bf16.msra.mxu0 0
    %320 = vmatprep.subr.bf16.mxu0 0
    %321 = vmatpush1.bf16.msra.mxu0 0
    %322 = vmatprep.subr.bf16.mxu0 0
    %323 = vmatpush1.bf16.msra.mxu0 0
    %324 = vmatprep.mubr.bf16.mxu0 0
    %325 = vmatmul.mubr.bf16.gmra.mrb[0].mxu0 %v99
    %v326 = vpop.f32.mrb[0].mxu0
    %v327 = vadd.f32 0.0, %v326
    %v328 = vpop.f32.mrb[0].mxu0
    %v329 = vadd.f32 0.0, %v328
    %v330 = vpop.f32.mrb[0].mxu0
    %v331 = vpop.f32.mrb[0].mxu0
    %332 = vdwg.mxu0
    %333 = vmatprep.subr.bf16.mxu0 %v231
    %334 = vmatpush1.bf16.msra.mxu0 %v230
    %335 = vmatprep.subr.bf16.mxu0 %v235
    %336 = vmatpush1.bf16.msra.mxu0 %v234
    %337 = vmatprep.subr.bf16.mxu0 %v239
    %338 = vmatpush1.bf16.msra.mxu0 %v238
    %339 = vmatprep.subr.bf16.mxu0 %v243
    %340 = vmatpush1.bf16.msra.mxu0 %v242
    %341 = vmatprep.subr.bf16.mxu0 %v247
    %342 = vmatpush1.bf16.msra.mxu0 %v246
    %343 = vmatprep.subr.bf16.mxu0 %v251
    %344 = vmatpush1.bf16.msra.mxu0 %v250
    %345 = vmatprep.subr.bf16.mxu0 %v255
    %346 = vmatpush1.bf16.msra.mxu0 %v254
    %347 = vmatprep.subr.bf16.mxu0 %v259
    %348 = vmatpush1.bf16.msra.mxu0 %v258
    %349 = vmatprep.subr.bf16.mxu0 0
    %350 = vmatpush1.bf16.msra.mxu0 0
    %351 = vmatprep.subr.bf16.mxu0 0
    %352 = vmatpush1.bf16.msra.mxu0 0
    %353 = vmatprep.subr.bf16.mxu0 0
    %354 = vmatpush1.bf16.msra.mxu0 0
    %355 = vmatprep.subr.bf16.mxu0 0
    %356 = vmatpush1.bf16.msra.mxu0 0
    %357 = vmatprep.subr.bf16.mxu0 0
    %358 = vmatpush1.bf16.msra.mxu0 0
    %359 = vmatprep.subr.bf16.mxu0 0
    %360 = vmatpush1.bf16.msra.mxu0 0
    %361 = vmatprep.subr.bf16.mxu0 0
    %362 = vmatpush1.bf16.msra.mxu0 0
    %363 = vmatprep.subr.bf16.mxu0 0
    %364 = vmatpush1.bf16.msra.mxu0 0
    %365 = vmatprep.mubr.bf16.mxu0 0
    %366 = vmatmul.mubr.bf16.gmra.mrb[0].mxu0 %v99
    %v367 = vpop.f32.mrb[0].mxu0
    %v368 = vadd.f32 0.0, %v367
    %v369 = vpop.f32.mrb[0].mxu0
    %v370 = vadd.f32 0.0, %v369
    %v371 = vpop.f32.mrb[0].mxu0
    %v372 = vpop.f32.mrb[0].mxu0
    %373 = vdwg.mxu0
    %v378 = vcombine.low %v327, %v329
    %v379 = vcombine.low %v368, %v370
    %v381 = vunpack.c.l.s4 1966171168
    %v382 = vunpack.c.0.s8 %v381
    %v383 = vlaneseq
    %v384 = vshrl.u32 %v383, 7
    %v385 = vsub.s32 %v382, %v384
    %v386 = vrot.slane %v378, %v385
    %v388 = vunpack.c.l.s4 1966171168
    %v389 = vunpack.c.0.s8 %v388
    %v390 = vlaneseq
    %v391 = vshrl.u32 %v390, 7
    %v392 = vsub.s32 %v389, %v391
    %v393 = vrot.slane %v379, %v392
    %v394 = vcombine.low %v386, %v393
    %v396 = vunpack.c.l.s4 1966171168
    %v397 = vunpack.c.0.s8 %v396
    %v398 = vlaneseq
    %v399 = vshrl.u32 %v398, 7
    %v400 = vsub.s32 %v397, %v399
    %v401 = vrot.slane %v394, %v400
    %v403 = vadd.f32 %v98, %v401
    %v404 = vxor.u32 %v403, 2147483648
    %v405 = vmul.f32 %v404, 1.442695
    %v406 = vpow.pop %v405
    %v407 = vadd.f32 %v406, 1.0
    %v408 = vrcp.pop %v407
    %v409 = vmul.f32 1.0, %v408
    %v411 = vrot.slane %v403, 1
    %v413 = vxor.u32 %v411, 2147483648
    %v414 = vmul.f32 %v413, 1.442695
    %v415 = vpow.pop %v414
    %v416 = vadd.f32 %v415, 1.0
    %v417 = vrcp.pop %v416
    %v418 = vmul.f32 1.0, %v417
    %v419 = vrot.slane %v403, 2
    %v421 = vtanh.pop %v419
    %v422 = vrot.slane %v403, 3
    %v424 = vxor.u32 %v422, 2147483648
    %v425 = vmul.f32 %v424, 1.442695
    %v426 = vpow.pop %v425
    %v427 = vadd.f32 %v426, 1.0
    %v428 = vrcp.pop %v427
    %v429 = vmul.f32 1.0, %v428
    %v430 = vmul.f32 %v418, %v88
    %v431 = vmul.f32 %v409, %v421
    %v432 = vadd.f32 %v430, %v431
    %v433 = vtanh.pop %v432
    %v434 = vmul.f32 %v429, %v433
    %v435 = vpack.c.bf16 %v434, %v434
    %v436 = vld [vmem:[#allocation9] sm:$0xf]
    %v437 = vld [vmem:[#allocation9 + $0x4] sm:$0xf]
    %v438 = vld [vmem:[#allocation9 + $0x8] sm:$0xf]
    %v439 = vld [vmem:[#allocation9 + $0xc] sm:$0xf]
    %v440 = vld [vmem:[#allocation9 + $0x10] sm:$0xf]
    %v441 = vld [vmem:[#allocation9 + $0x14] sm:$0xf]
    %v442 = vld [vmem:[#allocation9 + $0x18] sm:$0xf]
    %v443 = vld [vmem:[#allocation9 + $0x1c] sm:$0xf]
    %v444 = vld [vmem:[#allocation9 + $0x20] sm:$0xf]
    %v445 = vld [vmem:[#allocation9 + $0x24] sm:$0xf]
    %v446 = vld [vmem:[#allocation9 + $0x28] sm:$0xf]
    %v447 = vld [vmem:[#allocation9 + $0x2c] sm:$0xf]
    %v448 = vld [vmem:[#allocation9 + $0x30] sm:$0xf]
    %v449 = vld [vmem:[#allocation9 + $0x34] sm:$0xf]
    %v450 = vld [vmem:[#allocation9 + $0x38] sm:$0xf]
    %v451 = vld [vmem:[#allocation9 + $0x3c] sm:$0xf]
    %v452 = vld [vmem:[%s7] sm:$0x1]
    %v469 = vunpack.c.l.b16 %v436
    %v470 = vunpack.c.l.b16 %v437
    %v471 = vunpack.c.l.b16 %v438
    %v472 = vunpack.c.l.b16 %v439
    %v473 = vunpack.c.l.b16 %v440
    %v474 = vunpack.c.l.b16 %v441
    %v475 = vunpack.c.l.b16 %v442
    %v476 = vunpack.c.l.b16 %v443
    %v477 = vunpack.c.l.b16 %v444
    %v478 = vunpack.c.l.b16 %v445
    %v479 = vunpack.c.l.b16 %v446
    %v480 = vunpack.c.l.b16 %v447
    %v481 = vunpack.c.l.b16 %v448
    %v482 = vunpack.c.l.b16 %v449
    %v483 = vunpack.c.l.b16 %v450
    %v484 = vunpack.c.l.b16 %v451
    %v485 = vpack.c.b16 %v470, %v469
    %v486 = vpack.c.b16 %v472, %v471
    %v487 = vpack.c.b16 %v474, %v473
    %v488 = vpack.c.b16 %v476, %v475
    %v489 = vpack.c.b16 %v478, %v477
    %v490 = vpack.c.b16 %v480, %v479
    %v491 = vpack.c.b16 %v482, %v481
    %v492 = vpack.c.b16 %v484, %v483
    %501 = vmatprep.subr.bf16.mxu0 0
    %502 = vmatpush1.bf16.msra.mxu0 %v485
    %503 = vmatprep.subr.bf16.mxu0 0
    %504 = vmatpush1.bf16.msra.mxu0 %v486
    %505 = vmatprep.subr.bf16.mxu0 0
    %506 = vmatpush1.bf16.msra.mxu0 %v487
    %507 = vmatprep.subr.bf16.mxu0 0
    %508 = vmatpush1.bf16.msra.mxu0 %v488
    %509 = vmatprep.subr.bf16.mxu0 0
    %510 = vmatpush1.bf16.msra.mxu0 %v489
    %511 = vmatprep.subr.bf16.mxu0 0
    %512 = vmatpush1.bf16.msra.mxu0 %v490
    %513 = vmatprep.subr.bf16.mxu0 0
    %514 = vmatpush1.bf16.msra.mxu0 %v491
    %515 = vmatprep.subr.bf16.mxu0 0
    %516 = vmatpush1.bf16.msra.mxu0 %v492
    %517 = vmatprep.subr.bf16.mxu0 0
    %518 = vmatpush1.bf16.msra.mxu0 0
    %519 = vmatprep.subr.bf16.mxu0 0
    %520 = vmatpush1.bf16.msra.mxu0 0
    %521 = vmatprep.subr.bf16.mxu0 0
    %522 = vmatpush1.bf16.msra.mxu0 0
    %523 = vmatprep.subr.bf16.mxu0 0
    %524 = vmatpush1.bf16.msra.mxu0 0
    %525 = vmatprep.subr.bf16.mxu0 0
    %526 = vmatpush1.bf16.msra.mxu0 0
    %527 = vmatprep.subr.bf16.mxu0 0
    %528 = vmatpush1.bf16.msra.mxu0 0
    %529 = vmatprep.subr.bf16.mxu0 0
    %530 = vmatpush1.bf16.msra.mxu0 0
    %531 = vmatprep.subr.bf16.mxu0 0
    %532 = vmatpush1.bf16.msra.mxu0 0
    %533 = vmatprep.mubr.bf16.mxu0 0
    %534 = vmatmul.mubr.bf16.gmra.mrb[0].mxu0 %v435
    %v535 = vpop.f32.mrb[0].mxu0
    %v536 = vadd.f32 %v452, %v535
    %v537 = vpop.f32.mrb[0].mxu0
    %v538 = vpop.f32.mrb[0].mxu0
    %v539 = vpop.f32.mrb[0].mxu0
    %540 = vdwg.mxu0
    %v541 = vlaneseq
    %v542 = vand.u32 %v541, 127
    %vm543 = vcmp.lt.s32.totalorder %v542, 17
    %v544 = vsel %vm543, %v536, -1e+30
    %vm545 = vcmask 1040384
    %v546 = vsel %vm545, %v544, -inf
    %547 = vmax.xlane.f32.xlu0 %v546
    %v548 = vpop.xlane.xlu0 %547
    %v549 = vsub.f32 %v544, %v548
    %v550 = vmul.f32 %v549, 1.442695
    %v551 = vpow.pop %v550
    %v552 = vsel %vm545, %v551, 0.0
    %553 = vadd.xlane.f32.xlu0 %v552
    %v554 = vpop.xlane.xlu0 %553
    %v555 = vrcp.pop %v554
    %v556 = vmul.f32 %v551, %v555
    %vm557 = vcmp.eq.s32.totalorder %v542, 17
    %v558 = vsel %vm557, %v536, 0.0
    %v559 = vadd.f32 %v556, %v558
    %560 = vst [vmem:[%s8] sm:$0x1] %v559
    %561 = vst [vmem:[#allocation10] sm:$0x1] %v434
    %562 = vst [vmem:[#allocation11] sm:$0x1] %v432
    // Predicated region
    $region50: #{policy_forward.1} parent=1 // pred_check
      _
    $region51: #{policy_forward.1} parent=1 // pred_check_branch
      %564 = sbr.rel (0) target = $region53
    $region52: #{policy_forward.1} parent=1 // pred_region
      _
    $region53: #{policy_forward.1} parent=1 // pred_fallthru
      _
    // Predicated region
    $region54: #{policy_forward.1} parent=1 // pred_check
      _
    $region55: #{policy_forward.1} parent=1 // pred_check_branch
      %566 = sbr.rel (0) target = $region57
    $region56: #{policy_forward.1} parent=1 // pred_region
      %s568 = ssub.s32 16, 16
      %569 = vsyncadd [#allocation4], %s568
      %s571 = sshll.u32 [#allocation10], 4
      %s572 = int_to_ptr.vmem [resolvable:$true] %s571
      %574 = dma.vmem_to_hbm [thread:$0]  %s572, 16, %s9, [#allocation4]
    $region57: #{policy_forward.1} parent=1 // pred_fallthru
      _
    // Predicated region
    $region58: #{policy_forward.1} parent=1 // pred_check
      _
    $region59: #{policy_forward.1} parent=1 // pred_check_branch
      %576 = sbr.rel (0) target = $region61
    $region60: #{policy_forward.1} parent=1 // pred_region
      %s578 = ssub.s32 16, 16
      %579 = vsyncadd [#allocation12], %s578
      %s581 = sshll.u32 [#allocation11], 4
      %s582 = int_to_ptr.vmem [resolvable:$true] %s581
      %584 = dma.vmem_to_hbm [thread:$0]  %s582, 16, %s10, [#allocation12]
    $region61: #{policy_forward.1} parent=1 // pred_fallthru
      _
    // Predicated region
    $region62: #{policy_forward.1} parent=1 // pred_check
      _
    $region63: #{policy_forward.1} parent=1 // pred_check_branch
      %586 = sbr.rel (0) target = $region65
    $region64: #{policy_forward.1} parent=1 // pred_region
      _
    $region65: #{policy_forward.1} parent=1 // pred_fallthru
      _
    // Predicated region
    $region66: #{policy_forward.1} parent=1 // pred_check
      _
    $region67: #{policy_forward.1} parent=1 // pred_check_branch
      %588 = sbr.rel (0) target = $region69
    $region68: #{policy_forward.1} parent=1 // pred_region
      %589 = dma.done [#allocation4], 16
    $region69: #{policy_forward.1} parent=1 // pred_fallthru
      _
    // Predicated region
    $region70: #{policy_forward.1} parent=1 // pred_check
      _
    $region71: #{policy_forward.1} parent=1 // pred_check_branch
      %591 = sbr.rel (0) target = $region73
    $region72: #{policy_forward.1} parent=1 // pred_region
      %592 = dma.done [#allocation12], 16
    $region73: #{policy_forward.1} parent=1 // pred_fallthru
      _
    %593 = vsyncpa [#allocation3], 1
    %594 = vsyncpa [#allocation8], 1
    %595 = vsyncpa [#allocation4], 1
    %596 = vsyncpa [#allocation12], 1
    %597 = vsyncpa [#allocation5], 1

</llo_original>
